<compile_context>
chip_gen: v5e
topology: v5e:2x2
jax: 0.10.0
libtpu: 0.0.40
codegen_flags: <defaults>
</compile_context>

<pallas_src>
import functools

import jax
import jax.numpy as jnp
from jax.experimental import pallas as pl
from jax.experimental.pallas import tpu as pltpu


# ---------------------------------------------------------------------------
# Kernel
# ---------------------------------------------------------------------------
def gru_cell_kernel(x_ref, h_ref,
                    wx_ref, whru_ref, whc_ref, wo_ref,
                    bru_ref, bc_ref, bo_ref,
                    out_ref, hnext_ref):
    Hp = h_ref.shape[1]

    x_bf = x_ref[...]                    # [TB, D_in]  bf16 (cast once in wrapper)
    h = h_ref[...]                       # [TB, Hp]    f32
    h_bf = h.astype(jnp.bfloat16)

    # Fused x-side matmul: columns are (reset | update | candidate), each Hp wide.
    xw = jnp.dot(x_bf, wx_ref[...], preferred_element_type=jnp.float32)    # [TB, 3*Hp]
    # Fused h-side matmul for the reset/update gates.
    hw = jnp.dot(h_bf, whru_ref[...], preferred_element_type=jnp.float32)  # [TB, 2*Hp]

    gates = hw + xw[:, :2 * Hp] + bru_ref[...]          # [TB, 2*Hp]  f32
    reset_gate = jax.nn.sigmoid(gates[:, :Hp])          # gamma
    update_gate = jax.nn.sigmoid(gates[:, Hp:])         # beta

    rh_bf = (reset_gate * h).astype(jnp.bfloat16)
    cc = (xw[:, 2 * Hp:]
          + jnp.dot(rh_bf, whc_ref[...], preferred_element_type=jnp.float32)
          + bc_ref[...])
    cnm = jnp.tanh(cc)

    h_next = (1.0 - update_gate) * h + update_gate * cnm
    output = jax.nn.sigmoid(
        jnp.dot(h_next.astype(jnp.bfloat16), wo_ref[...],
                preferred_element_type=jnp.float32) + bo_ref[...])

    out_ref[...] = output.astype(out_ref.dtype)          # bf16 writeback
    hnext_ref[...] = h_next.astype(hnext_ref.dtype)      # f32 recurrent state


# ---------------------------------------------------------------------------
# Helpers
# ---------------------------------------------------------------------------
def _round_up(n, m):
    return ((n + m - 1) // m) * m


def _pick_block_b(B, cap=256):
    """Batch tile: as tall as possible; >=2 grid steps when batch allows (v7x)."""
    Bp = _round_up(B, 8)
    if Bp >= 2 * cap:
        return cap                                   # many full-height tiles
    if Bp >= 2 * 128:
        return _round_up((Bp + 1) // 2, 8)           # 2 tiles, each >= 128 rows
    return min(Bp, cap)                              # small batch: single tile


def _const_spec(arr):
    """Grid-invariant weight/bias block: full array, single-buffered."""
    idx = lambda i: (0, 0)
    try:
        return pl.BlockSpec(arr.shape, idx, pipeline_mode=pl.Buffered(1))
    except TypeError:
        # Older pallas without pipeline_mode support: fall back to default.
        return pl.BlockSpec(arr.shape, idx)


def _vmem_limit_bytes(prepared, block_b, d_in, hp):
    """Explicit scoped-VMEM budget: weights (single-buffered, counted 2x for
    safety) + double-buffered streamed tiles + generous intermediates."""
    weight_bytes = sum(int(p.size) * p.dtype.itemsize for p in prepared)
    stream_bytes = 2 * block_b * (d_in * 2 + hp * 4 + hp * 2 + hp * 4)
    interm_bytes = block_b * hp * 16 * 4
    est = 2 * weight_bytes + stream_bytes + interm_bytes + (2 << 20)
    return int(min(max(est, 16 << 20), 64 << 20))    # keep v7x (64 MiB) headroom


# ---------------------------------------------------------------------------
# Parameter preparation (transpose / split / pad / fuse / bf16-cast)
# ---------------------------------------------------------------------------
def prepare_params(params, input_dim, hidden_dim):
    """Convert PyTorch-convention Linear params into the fused/padded kernel layout."""
    w_in, b_in, w_hid, b_hid, w_out, b_out = params
    H = hidden_dim
    Hp = _round_up(max(H, 128), 128)

    w_in_t = w_in.T        # [D_in+H, 2H]
    w_hid_t = w_hid.T      # [D_in+H, H]
    w_out_t = w_out.T      # [H, H]

    # Split the cat([x, h]) rows.
    wi_x, wi_h = w_in_t[:input_dim], w_in_t[input_dim:]
    wc_x, wc_h = w_hid_t[:input_dim], w_hid_t[input_dim:]

    # Split the 2H output axis of the input_layer into reset | update gates.
    wi_x_r, wi_x_u = wi_x[:, :H], wi_x[:, H:]
    wi_h_r, wi_h_u = wi_h[:, :H], wi_h[:, H:]
    b_r, b_u = b_in[:H], b_in[H:]

    def pad_n(w):          # pad output dim H -> Hp
        return jnp.pad(w, ((0, 0), (0, Hp - w.shape[1])))

    def pad_kn(w):         # pad both dims (h-input side / square weights) -> Hp
        return jnp.pad(w, ((0, Hp - w.shape[0]), (0, Hp - w.shape[1])))

    def pad_b(b):          # pad bias -> [1, Hp]
        return jnp.pad(b, (0, Hp - b.shape[0])).reshape(1, Hp)

    bf16 = jnp.bfloat16
    wx_fused = jnp.concatenate([pad_n(wi_x_r), pad_n(wi_x_u), pad_n(wc_x)],
                               axis=1).astype(bf16)             # [D_in, 3*Hp]
    wh_ru = jnp.concatenate([pad_kn(wi_h_r), pad_kn(wi_h_u)],
                            axis=1).astype(bf16)                # [Hp, 2*Hp]
    wh_c = pad_kn(wc_h).astype(bf16)                            # [Hp, Hp]
    w_o = pad_kn(w_out_t).astype(bf16)                          # [Hp, Hp]

    b_ru = jnp.concatenate([pad_b(b_r), pad_b(b_u)], axis=1).astype(jnp.float32)
    b_c = pad_b(b_hid).astype(jnp.float32)
    b_o = pad_b(b_out).astype(jnp.float32)

    return (wx_fused, wh_ru, wh_c, w_o, b_ru, b_c, b_o)


# ---------------------------------------------------------------------------
# Wrapper
# ---------------------------------------------------------------------------
@functools.partial(jax.jit, static_argnames=("hidden_dim", "block_b", "trim"))
def gru_cell(x, h, prepared, *, hidden_dim, block_b=None, trim=True):
    """Pallas GRUCell forward.  x: [B, D_in] f32, h: [B, H] f32.

    Returns (output, h_next).  output is bf16 (sigmoid-bounded), h_next is f32.
    With trim=False the padded [Bp, Hp] slabs are returned (padded columns are
    exactly zero in h_next), avoiding the extra HBM copy of the slice ops.
    """
    B, D_in = x.shape
    wx, wh_ru, wh_c, w_o, b_ru, b_c, b_o = prepared
    Hp = wh_c.shape[0]

    if block_b is None:
        block_b = _pick_block_b(B)

    # x only ever feeds the MXU -> cast once here (halves its HBM->VMEM DMA).
    x_bf = x.astype(jnp.bfloat16)
    # Re-pad h with zeros (invariant: padded hidden columns must enter as 0).
    h_p = jnp.pad(h, ((0, 0), (0, Hp - h.shape[1])))
    Bp = _round_up(B, block_b)
    if Bp != B:
        x_bf = jnp.pad(x_bf, ((0, Bp - B), (0, 0)))
        h_p = jnp.pad(h_p, ((0, Bp - B), (0, 0)))

    grid = (Bp // block_b,)

    def batch_spec(cols):
        return pl.BlockSpec((block_b, cols), lambda i: (i, 0))

    flops = 2 * Bp * (D_in * 3 * Hp + Hp * 2 * Hp + Hp * Hp + Hp * Hp)
    bytes_accessed = (x_bf.size * 2 + h_p.size * 4
                      + Bp * Hp * 2 + Bp * Hp * 4
                      + sum(int(p.size) * p.dtype.itemsize for p in prepared))
    cost = pl.CostEstimate(flops=flops,
                           transcendentals=4 * Bp * Hp,
                           bytes_accessed=bytes_accessed)

    out, h_next = pl.pallas_call(
        gru_cell_kernel,
        out_shape=(jax.ShapeDtypeStruct((Bp, Hp), jnp.bfloat16),
                   jax.ShapeDtypeStruct((Bp, Hp), jnp.float32)),
        grid=grid,
        in_specs=[batch_spec(D_in), batch_spec(Hp),
                  _const_spec(wx), _const_spec(wh_ru), _const_spec(wh_c),
                  _const_spec(w_o), _const_spec(b_ru), _const_spec(b_c),
                  _const_spec(b_o)],
        out_specs=(pl.BlockSpec((block_b, Hp), lambda i: (i, 0)),
                   pl.BlockSpec((block_b, Hp), lambda i: (i, 0))),
        compiler_params=pltpu.CompilerParams(
            dimension_semantics=("parallel",),
            vmem_limit_bytes=_vmem_limit_bytes(prepared, block_b, D_in, Hp)),
        cost_estimate=cost,
    )(x_bf, h_p, wx, wh_ru, wh_c, w_o, b_ru, b_c, b_o)

    if trim:
        return out[:B, :hidden_dim], h_next[:B, :hidden_dim]
    return out, h_next


# ---------------------------------------------------------------------------
# Parameters (PyTorch nn.Linear convention) and pure-JAX reference
# ---------------------------------------------------------------------------
def make_params(key, input_dim, hidden_dim):
    """Synthetic params with PyTorch Linear shapes ([out, in] weights)."""
    ks = jax.random.split(key, 6)
    D = input_dim + hidden_dim

    def init(k, shape, fan_in):
        bound = 1.0 / jnp.sqrt(fan_in)
        return jax.random.uniform(k, shape, jnp.float32, -bound, bound)

    w_in = init(ks[0], (2 * hidden_dim, D), D)
    b_in = init(ks[1], (2 * hidden_dim,), D)
    w_hid = init(ks[2], (hidden_dim, D), D)
    b_hid = init(ks[3], (hidden_dim,), D)
    w_out = init(ks[4], (hidden_dim, hidden_dim), hidden_dim)
    b_out = init(ks[5], (hidden_dim,), hidden_dim)
    return (w_in, b_in, w_hid, b_hid, w_out, b_out)


def gru_cell_ref(x, h, params):
    """Pure-JAX re-implementation of the PyTorch forward (f32 everywhere)."""
    w_in, b_in, w_hid, b_hid, w_out, b_out = params
    H = h.shape[1]
    combined = jnp.concatenate([x, h], axis=1)
    comb = combined @ w_in.T + b_in
    reset = jax.nn.sigmoid(comb[:, :H])
    update = jax.nn.sigmoid(comb[:, H:])
    combined2 = jnp.concatenate([x, reset * h], axis=1)
    cnm = jnp.tanh(combined2 @ w_hid.T + b_hid)
    h_next = (1 - update) * h + update * cnm
    output = jax.nn.sigmoid(h_next @ w_out.T + b_out)
    return output, h_next


if __name__ == "__main__":
    batch, input_dim, hidden_dim = 8, 16, 32

    key = jax.random.PRNGKey(0)
    kx, kh, kp = jax.random.split(key, 3)
    x = jax.random.normal(kx, (batch, input_dim), jnp.float32)
    h = jax.random.normal(kh, (batch, hidden_dim), jnp.float32)
    params = make_params(kp, input_dim, hidden_dim)
    prepared = prepare_params(params, input_dim, hidden_dim)

    output, h_next = gru_cell(x, h, prepared, hidden_dim=hidden_dim)
    jax.block_until_ready((output, h_next))

    out_ref, hn_ref = gru_cell_ref(x, h, params)
    # bf16 matmul operands (f32 accumulation) + bf16 output slab -> relaxed tol.
    assert jnp.allclose(output.astype(jnp.float32), out_ref, atol=1e-2), "output mismatch"
    assert jnp.allclose(h_next, hn_ref, atol=1e-2), "h_next mismatch"

    print("KERNEL_OK")
</pallas_src>

<mosaic_0001>
module attributes {stable_mosaic.version = 11 : i64} {
  func.func @gru_cell_kernel(%arg0: i32, %arg1: memref<8x16xbf16, #tpu.memory_space<vmem>>, %arg2: memref<8x128xf32, #tpu.memory_space<vmem>>, %arg3: memref<16x384xbf16, #tpu.memory_space<vmem>>, %arg4: memref<128x256xbf16, #tpu.memory_space<vmem>>, %arg5: memref<128x128xbf16, #tpu.memory_space<vmem>>, %arg6: memref<128x128xbf16, #tpu.memory_space<vmem>>, %arg7: memref<1x256xf32, #tpu.memory_space<vmem>>, %arg8: memref<1x128xf32, #tpu.memory_space<vmem>>, %arg9: memref<1x128xf32, #tpu.memory_space<vmem>>, %arg10: memref<8x128xbf16, #tpu.memory_space<vmem>>, %arg11: memref<8x128xf32, #tpu.memory_space<vmem>>) attributes {dimension_semantics = [#tpu.dimension_semantics<parallel>], iteration_bounds = array<i64: 1>, scalar_prefetch = 0 : i64, scratch_operands = 0 : i64, tpu.core_type = #tpu.core_type<tc>, window_params = [{transform_indices = @transform_0, window_bounds = array<i64: 8, 16>}, {transform_indices = @transform_1, window_bounds = array<i64: 8, 128>}, {pipeline_mode = #tpu.pipeline_mode<synchronous>, transform_indices = @transform_2, window_bounds = array<i64: 16, 384>}, {pipeline_mode = #tpu.pipeline_mode<synchronous>, transform_indices = @transform_3, window_bounds = array<i64: 128, 256>}, {pipeline_mode = #tpu.pipeline_mode<synchronous>, transform_indices = @transform_4, window_bounds = array<i64: 128, 128>}, {pipeline_mode = #tpu.pipeline_mode<synchronous>, transform_indices = @transform_5, window_bounds = array<i64: 128, 128>}, {pipeline_mode = #tpu.pipeline_mode<synchronous>, transform_indices = @transform_6, window_bounds = array<i64: 1, 256>}, {pipeline_mode = #tpu.pipeline_mode<synchronous>, transform_indices = @transform_7, window_bounds = array<i64: 1, 128>}, {pipeline_mode = #tpu.pipeline_mode<synchronous>, transform_indices = @transform_8, window_bounds = array<i64: 1, 128>}, {transform_indices = @transform_9, window_bounds = array<i64: 8, 128>}, {transform_indices = @transform_10, window_bounds = array<i64: 8, 128>}]} {
    %c0 = arith.constant 0 : index
    %c0_0 = arith.constant 0 : index
    %0 = vector.load %arg1[%c0, %c0_0] : memref<8x16xbf16, #tpu.memory_space<vmem>>, vector<8x16xbf16>
    %c0_1 = arith.constant 0 : index
    %c0_2 = arith.constant 0 : index
    %1 = vector.load %arg2[%c0_1, %c0_2] : memref<8x128xf32, #tpu.memory_space<vmem>>, vector<8x128xf32>
    %2 = arith.truncf %1 : vector<8x128xf32> to vector<8x128xbf16>
    %c0_3 = arith.constant 0 : index
    %c0_4 = arith.constant 0 : index
    %3 = vector.load %arg3[%c0_3, %c0_4] : memref<16x384xbf16, #tpu.memory_space<vmem>>, vector<16x384xbf16>
    %cst = arith.constant dense<0.000000e+00> : vector<8x384xf32>
    %4 = tpu.matmul %0, %3, %cst {dimension_numbers = #tpu.dot_dimension_numbers<[1], [0], [0], [1], [0, 0, 1, 1], [], []>} : vector<8x16xbf16>, vector<16x384xbf16>, vector<8x384xf32> -> vector<8x384xf32>
    %c0_5 = arith.constant 0 : index
    %c0_6 = arith.constant 0 : index
    %5 = vector.load %arg4[%c0_5, %c0_6] : memref<128x256xbf16, #tpu.memory_space<vmem>>, vector<128x256xbf16>
    %cst_7 = arith.constant dense<0.000000e+00> : vector<8x256xf32>
    %6 = tpu.matmul %2, %5, %cst_7 {dimension_numbers = #tpu.dot_dimension_numbers<[1], [0], [0], [1], [0, 0, 1, 1], [], []>} : vector<8x128xbf16>, vector<128x256xbf16>, vector<8x256xf32> -> vector<8x256xf32>
    %7 = vector.extract_strided_slice %4 {offsets = [0, 0], sizes = [8, 256], strides = [1, 1]} : vector<8x384xf32> to vector<8x256xf32>
    %8 = arith.addf %6, %7 : vector<8x256xf32>
    %c0_8 = arith.constant 0 : index
    %c0_9 = arith.constant 0 : index
    %9 = vector.load %arg7[%c0_8, %c0_9] : memref<1x256xf32, #tpu.memory_space<vmem>>, vector<1x256xf32>
    %10 = vector.broadcast %9 : vector<1x256xf32> to vector<8x256xf32>
    %11 = arith.addf %8, %10 : vector<8x256xf32>
    %12 = vector.extract_strided_slice %11 {offsets = [0, 0], sizes = [8, 128], strides = [1, 1]} : vector<8x256xf32> to vector<8x128xf32>
    %13 = arith.negf %12 : vector<8x128xf32>
    %14 = math.exp %13 : vector<8x128xf32>
    %cst_10 = arith.constant 1.000000e+00 : f32
    %15 = vector.broadcast %cst_10 : f32 to vector<8x128xf32>
    %16 = arith.addf %15, %14 : vector<8x128xf32>
    %17 = arith.divf %15, %16 : vector<8x128xf32>
    %18 = vector.extract_strided_slice %11 {offsets = [0, 128], sizes = [8, 128], strides = [1, 1]} : vector<8x256xf32> to vector<8x128xf32>
    %19 = arith.negf %18 : vector<8x128xf32>
    %20 = math.exp %19 : vector<8x128xf32>
    %cst_11 = arith.constant 1.000000e+00 : f32
    %21 = vector.broadcast %cst_11 : f32 to vector<8x128xf32>
    %22 = arith.addf %21, %20 : vector<8x128xf32>
    %23 = arith.divf %21, %22 : vector<8x128xf32>
    %24 = arith.mulf %17, %1 : vector<8x128xf32>
    %25 = arith.truncf %24 : vector<8x128xf32> to vector<8x128xbf16>
    %26 = vector.extract_strided_slice %4 {offsets = [0, 256], sizes = [8, 128], strides = [1, 1]} : vector<8x384xf32> to vector<8x128xf32>
    %c0_12 = arith.constant 0 : index
    %c0_13 = arith.constant 0 : index
    %27 = vector.load %arg5[%c0_12, %c0_13] : memref<128x128xbf16, #tpu.memory_space<vmem>>, vector<128x128xbf16>
    %cst_14 = arith.constant dense<0.000000e+00> : vector<8x128xf32>
    %28 = tpu.matmul %25, %27, %cst_14 {dimension_numbers = #tpu.dot_dimension_numbers<[1], [0], [0], [1], [0, 0, 1, 1], [], []>} : vector<8x128xbf16>, vector<128x128xbf16>, vector<8x128xf32> -> vector<8x128xf32>
    %29 = arith.addf %26, %28 : vector<8x128xf32>
    %c0_15 = arith.constant 0 : index
    %c0_16 = arith.constant 0 : index
    %30 = vector.load %arg8[%c0_15, %c0_16] : memref<1x128xf32, #tpu.memory_space<vmem>>, vector<1x128xf32>
    %31 = vector.broadcast %30 : vector<1x128xf32> to vector<8x128xf32>
    %32 = arith.addf %29, %31 : vector<8x128xf32>
    %33 = math.tanh %32 : vector<8x128xf32>
    %cst_17 = arith.constant 1.000000e+00 : f32
    %34 = vector.broadcast %cst_17 : f32 to vector<8x128xf32>
    %35 = arith.subf %34, %23 : vector<8x128xf32>
    %36 = arith.mulf %35, %1 : vector<8x128xf32>
    %37 = arith.mulf %23, %33 : vector<8x128xf32>
    %38 = arith.addf %36, %37 : vector<8x128xf32>
    %39 = arith.truncf %38 : vector<8x128xf32> to vector<8x128xbf16>
    %c0_18 = arith.constant 0 : index
    %c0_19 = arith.constant 0 : index
    %40 = vector.load %arg6[%c0_18, %c0_19] : memref<128x128xbf16, #tpu.memory_space<vmem>>, vector<128x128xbf16>
    %cst_20 = arith.constant dense<0.000000e+00> : vector<8x128xf32>
    %41 = tpu.matmul %39, %40, %cst_20 {dimension_numbers = #tpu.dot_dimension_numbers<[1], [0], [0], [1], [0, 0, 1, 1], [], []>} : vector<8x128xbf16>, vector<128x128xbf16>, vector<8x128xf32> -> vector<8x128xf32>
    %c0_21 = arith.constant 0 : index
    %c0_22 = arith.constant 0 : index
    %42 = vector.load %arg9[%c0_21, %c0_22] : memref<1x128xf32, #tpu.memory_space<vmem>>, vector<1x128xf32>
    %43 = vector.broadcast %42 : vector<1x128xf32> to vector<8x128xf32>
    %44 = arith.addf %41, %43 : vector<8x128xf32>
    %45 = arith.negf %44 : vector<8x128xf32>
    %46 = math.exp %45 : vector<8x128xf32>
    %cst_23 = arith.constant 1.000000e+00 : f32
    %47 = vector.broadcast %cst_23 : f32 to vector<8x128xf32>
    %48 = arith.addf %47, %46 : vector<8x128xf32>
    %49 = arith.divf %47, %48 : vector<8x128xf32>
    %50 = arith.truncf %49 : vector<8x128xf32> to vector<8x128xbf16>
    %c0_24 = arith.constant 0 : index
    %c0_25 = arith.constant 0 : index
    %51 = vector.load %arg10[%c0_24, %c0_25] : memref<8x128xbf16, #tpu.memory_space<vmem>>, vector<8x128xbf16>
    tpu.vector_store %arg10[%c0_24, %c0_25], %50 {strides = array<i32>} : memref<8x128xbf16, #tpu.memory_space<vmem>>, vector<8x128xbf16>,
    %c0_26 = arith.constant 0 : index
    %c0_27 = arith.constant 0 : index
    %52 = vector.load %arg11[%c0_26, %c0_27] : memref<8x128xf32, #tpu.memory_space<vmem>>, vector<8x128xf32>
    tpu.vector_store %arg11[%c0_26, %c0_27], %38 {strides = array<i32>} : memref<8x128xf32, #tpu.memory_space<vmem>>, vector<8x128xf32>,
    return
  }
  func.func @transform_0(%arg0: i32) -> (i32, i32) {
    %c0_i32 = arith.constant 0 : i32
    %c0_i32_0 = arith.constant 0 : i32
    return %arg0, %c0_i32 : i32, i32
  }
  func.func @transform_1(%arg0: i32) -> (i32, i32) {
    %c0_i32 = arith.constant 0 : i32
    %c0_i32_0 = arith.constant 0 : i32
    return %arg0, %c0_i32 : i32, i32
  }
  func.func @transform_2(%arg0: i32) -> (i32, i32) {
    %c0_i32 = arith.constant 0 : i32
    %c0_i32_0 = arith.constant 0 : i32
    %c0_i32_1 = arith.constant 0 : i32
    return %c0_i32, %c0_i32_0 : i32, i32
  }
  func.func @transform_3(%arg0: i32) -> (i32, i32) {
    %c0_i32 = arith.constant 0 : i32
    %c0_i32_0 = arith.constant 0 : i32
    %c0_i32_1 = arith.constant 0 : i32
    return %c0_i32, %c0_i32_0 : i32, i32
  }
  func.func @transform_4(%arg0: i32) -> (i32, i32) {
    %c0_i32 = arith.constant 0 : i32
    %c0_i32_0 = arith.constant 0 : i32
    %c0_i32_1 = arith.constant 0 : i32
    return %c0_i32, %c0_i32_0 : i32, i32
  }
  func.func @transform_5(%arg0: i32) -> (i32, i32) {
    %c0_i32 = arith.constant 0 : i32
    %c0_i32_0 = arith.constant 0 : i32
    %c0_i32_1 = arith.constant 0 : i32
    return %c0_i32, %c0_i32_0 : i32, i32
  }
  func.func @transform_6(%arg0: i32) -> (i32, i32) {
    %c0_i32 = arith.constant 0 : i32
    %c0_i32_0 = arith.constant 0 : i32
    %c0_i32_1 = arith.constant 0 : i32
    return %c0_i32, %c0_i32_0 : i32, i32
  }
  func.func @transform_7(%arg0: i32) -> (i32, i32) {
    %c0_i32 = arith.constant 0 : i32
    %c0_i32_0 = arith.constant 0 : i32
    %c0_i32_1 = arith.constant 0 : i32
    return %c0_i32, %c0_i32_0 : i32, i32
  }
  func.func @transform_8(%arg0: i32) -> (i32, i32) {
    %c0_i32 = arith.constant 0 : i32
    %c0_i32_0 = arith.constant 0 : i32
    %c0_i32_1 = arith.constant 0 : i32
    return %c0_i32, %c0_i32_0 : i32, i32
  }
  func.func @transform_9(%arg0: i32) -> (i32, i32) {
    %c0_i32 = arith.constant 0 : i32
    %c0_i32_0 = arith.constant 0 : i32
    return %arg0, %c0_i32 : i32, i32
  }
  func.func @transform_10(%arg0: i32) -> (i32, i32) {
    %c0_i32 = arith.constant 0 : i32
    %c0_i32_0 = arith.constant 0 : i32
    return %arg0, %c0_i32 : i32, i32
  }
}

</mosaic_0001>

<llo_original>
// kernel: gru_cell.1
$region0: #{gru_cell.1}
  #allocation0 [shape = 'u32[]', space=smem, size = 0x4, offset = 0x4, fixed_abs, tag = 'smem constant byte address 0x4 - core index']
  #allocation1 [shape = 'u32[72,128]{1,0:T(1,128)}', space=vmem, size = 0x9000, scoped, tag = 'internal scratch']
  %s0 = inlined_call_operand.vmem [shape: bf16[8,16], index: 0, kind: input, shape index: {}]
  %s1 = inlined_call_operand.vmem [shape: f32[8,128], index: 1, kind: input, shape index: {}]
  %s2 = inlined_call_operand.vmem [shape: bf16[16,384], index: 2, kind: input, shape index: {}]
  %s3 = inlined_call_operand.hbm [shape: bf16[128,256], index: 3, kind: input, shape index: {}]
  %s4 = inlined_call_operand.hbm [shape: bf16[128,128], index: 4, kind: input, shape index: {}]
  %s5 = inlined_call_operand.hbm [shape: bf16[128,128], index: 5, kind: input, shape index: {}]
  %s6 = inlined_call_operand.vmem [shape: f32[1,256], index: 6, kind: input, shape index: {}]
  %s7 = inlined_call_operand.vmem [shape: f32[1,128], index: 7, kind: input, shape index: {}]
  %s8 = inlined_call_operand.vmem [shape: f32[1,128], index: 8, kind: input, shape index: {}]
  %s9 = inlined_call_operand.hbm [shape: bf16[8,128], index: 9, kind: output, shape index: {0}]
  %s10 = inlined_call_operand.hbm [shape: f32[8,128], index: 10, kind: output, shape index: {1}]
  %11 = xla_tuple %s9, %s10
  %s12 = sld [smem:[#allocation0]]
  $region66: #{gru_cell.1} parent=0
    _
  %s14 = ssub.s32 1, %s12
  %s15 = scalar_select 0, %s14, %s12
  $region1: #{gru_cell.1} parent=0
    #allocation2 [shape = 'u8[65536]{0}', space=vmem, size = 0x10000, scoped, tag = 'input window, operand 3, single buffered']
    #allocation3 [shape = 's32[1]{0}', space=sflag, size = 0x4, scoped, tag = 'scoped memory for gru_cell.1']
    #allocation4 [shape = 's32[1]{0}', space=sflag, size = 0x4, scoped, tag = 'scoped memory for gru_cell.1']
    #allocation5 [shape = 'u8[32768]{0}', space=vmem, size = 0x8000, scoped, tag = 'input window, operand 4, single buffered']
    #allocation6 [shape = 's32[1]{0}', space=sflag, size = 0x4, scoped, tag = 'scoped memory for gru_cell.1']
    #allocation7 [shape = 'u8[32768]{0}', space=vmem, size = 0x8000, scoped, tag = 'input window, operand 5, single buffered']
    #allocation8 [shape = 'u8[2048]{0}', space=vmem, size = 0x800, scoped, tag = 'output window, operand 0, single buffered']
    #allocation9 [shape = 'u8[4096]{0}', space=vmem, size = 0x1000, scoped, tag = 'output window, operand 1, single buffered']
    #allocation10 [shape = 's32[1]{0}', space=sflag, size = 0x4, scoped, tag = 'scoped memory for gru_cell.1']
    %16 = vsyncpa [#allocation3], 0
    %17 = vsyncpa [#allocation6], 0
    %18 = vsyncpa [#allocation4], 0
    %19 = vsyncpa [#allocation10], 0
    // Predicated region
    $region2: #{gru_cell.1} parent=1 // pred_check
      _
    $region3: #{gru_cell.1} parent=1 // pred_check_branch
      %21 = sbr.rel (0) target = $region5
    $region4: #{gru_cell.1} parent=1 // pred_region
      _
    $region5: #{gru_cell.1} parent=1 // pred_fallthru
      _
    // Predicated region
    $region6: #{gru_cell.1} parent=1 // pred_check
      _
    $region7: #{gru_cell.1} parent=1 // pred_check_branch
      %23 = sbr.rel (0) target = $region9
    $region8: #{gru_cell.1} parent=1 // pred_region
      _
    $region9: #{gru_cell.1} parent=1 // pred_fallthru
      _
    // Predicated region
    $region10: #{gru_cell.1} parent=1 // pred_check
      _
    $region11: #{gru_cell.1} parent=1 // pred_check_branch
      %25 = sbr.rel (0) target = $region13
    $region12: #{gru_cell.1} parent=1 // pred_region
      _
    $region13: #{gru_cell.1} parent=1 // pred_fallthru
      _
    // Predicated region
    $region14: #{gru_cell.1} parent=1 // pred_check
      _
    $region15: #{gru_cell.1} parent=1 // pred_check_branch
      %27 = sbr.rel (0) target = $region17
    $region16: #{gru_cell.1} parent=1 // pred_region
      %29 = vsyncadd [#allocation3], 0
      %s30 = sshll.u32 %s3, 4
      %s31 = int_to_ptr.hbm [resolvable:$true] %s30
      %s32 = sshll.u32 [#allocation2], 4
      %s33 = int_to_ptr.vmem [resolvable:$true] %s32
      %38 = dma.hbm_to_vmem [thread:$0]  %s31, 2048, %s33, [#allocation3], 128, 128, 8
    $region17: #{gru_cell.1} parent=1 // pred_fallthru
      _
    // Predicated region
    $region18: #{gru_cell.1} parent=1 // pred_check
      _
    $region19: #{gru_cell.1} parent=1 // pred_check_branch
      %40 = sbr.rel (0) target = $region21
    $region20: #{gru_cell.1} parent=1 // pred_region
      %42 = vsyncadd [#allocation6], 0
      %s43 = sshll.u32 %s4, 4
      %s44 = int_to_ptr.hbm [resolvable:$true] %s43
      %s45 = sshll.u32 [#allocation5], 4
      %s46 = int_to_ptr.vmem [resolvable:$true] %s45
      %51 = dma.hbm_to_vmem [thread:$0]  %s44, 1024, %s46, [#allocation6], 64, 64, 4
    $region21: #{gru_cell.1} parent=1 // pred_fallthru
      _
    // Predicated region
    $region22: #{gru_cell.1} parent=1 // pred_check
      _
    $region23: #{gru_cell.1} parent=1 // pred_check_branch
      %53 = sbr.rel (0) target = $region25
    $region24: #{gru_cell.1} parent=1 // pred_region
      %55 = vsyncadd [#allocation6], 0
      %s56 = sshll.u32 %s5, 4
      %s57 = int_to_ptr.hbm [resolvable:$true] %s56
      %s58 = sshll.u32 [#allocation7], 4
      %s59 = int_to_ptr.vmem [resolvable:$true] %s58
      %64 = dma.hbm_to_vmem [thread:$0]  %s57, 1024, %s59, [#allocation6], 64, 64, 4
    $region25: #{gru_cell.1} parent=1 // pred_fallthru
      _
    // Predicated region
    $region26: #{gru_cell.1} parent=1 // pred_check
      _
    $region27: #{gru_cell.1} parent=1 // pred_check_branch
      %66 = sbr.rel (0) target = $region29
    $region28: #{gru_cell.1} parent=1 // pred_region
      _
    $region29: #{gru_cell.1} parent=1 // pred_fallthru
      _
    // Predicated region
    $region30: #{gru_cell.1} parent=1 // pred_check
      _
    $region31: #{gru_cell.1} parent=1 // pred_check_branch
      %68 = sbr.rel (0) target = $region33
    $region32: #{gru_cell.1} parent=1 // pred_region
      _
    $region33: #{gru_cell.1} parent=1 // pred_fallthru
      _
    // Predicated region
    $region34: #{gru_cell.1} parent=1 // pred_check
      _
    $region35: #{gru_cell.1} parent=1 // pred_check_branch
      %70 = sbr.rel (0) target = $region37
    $region36: #{gru_cell.1} parent=1 // pred_region
      _
    $region37: #{gru_cell.1} parent=1 // pred_fallthru
      _
    // Predicated region
    $region38: #{gru_cell.1} parent=1 // pred_check
      _
    $region39: #{gru_cell.1} parent=1 // pred_check_branch
      %72 = sbr.rel (0) target = $region41
    $region40: #{gru_cell.1} parent=1 // pred_region
      %74 = dma.done [#allocation3], 2048
    $region41: #{gru_cell.1} parent=1 // pred_fallthru
      _
    // Predicated region
    $region42: #{gru_cell.1} parent=1 // pred_check
      _
    $region43: #{gru_cell.1} parent=1 // pred_check_branch
      %76 = sbr.rel (0) target = $region45
    $region44: #{gru_cell.1} parent=1 // pred_region
      %78 = dma.done [#allocation6], 1024
    $region45: #{gru_cell.1} parent=1 // pred_fallthru
      _
    // Predicated region
    $region46: #{gru_cell.1} parent=1 // pred_check
      _
    $region47: #{gru_cell.1} parent=1 // pred_check_branch
      %80 = sbr.rel (0) target = $region49
    $region48: #{gru_cell.1} parent=1 // pred_region
      %82 = dma.done [#allocation6], 1024
    $region49: #{gru_cell.1} parent=1 // pred_fallthru
      _
    %v84 = vld [vmem:[%s0] sm:$0xf]
    %v85 = vld [vmem:[%s1] sm:$0xff]
    %v86 = vpack.c.bf16 %v85, %v85
    %v87 = vld [vmem:[%s2] sm:$0xff]
    %v88 = vld [vmem:[%s2 + $0x8] sm:$0xf]
    %v89 = vld [vmem:[%s2 + $0xc] sm:$0xff]
    %v90 = vld [vmem:[%s2 + $0x14] sm:$0xf]
    %v95 = vunpack.c.l.b16 %v87
    %v96 = vunpack.c.h.b16 %v87
    %v97 = vunpack.c.l.b16 %v88
    %v98 = vunpack.c.l.b16 %v89
    %v99 = vunpack.c.h.b16 %v89
    %v100 = vunpack.c.l.b16 %v90
    %v101 = vpack.c.b16 %v98, %v95
    %v102 = vpack.c.b16 %v99, %v96
    %v103 = vpack.c.b16 %v100, %v97
    %vm107 = vcmask 130048
    %v109 = vsel %vm107, %v84, 0
    %111 = vmatpush.bf16.msra.mxu0 0
    %112 = vmatpush.bf16.msra.mxu0 0
    %113 = vmatpush.bf16.msra.mxu0 0
    %114 = vmatpush.bf16.msra.mxu0 0
    %115 = vmatpush.bf16.msra.mxu0 0
    %116 = vmatpush.bf16.msra.mxu0 0
    %117 = vmatpush.bf16.msra.mxu0 0
    %118 = vmatpush.bf16.msra.mxu0 %v101
    %119 = vmatmul.bf16.gmra.mxu0 %v109
    %v120 = vpop.f32.mrf.mxu0
    %v121 = vadd.f32 0.0, %v120
    %v122 = vpop.f32.mrf.mxu0
    %123 = vdwg.mxu0
    %124 = vmatpush.bf16.msra.mxu0 0
    %125 = vmatpush.bf16.msra.mxu0 0
    %126 = vmatpush.bf16.msra.mxu0 0
    %127 = vmatpush.bf16.msra.mxu0 0
    %128 = vmatpush.bf16.msra.mxu0 0
    %129 = vmatpush.bf16.msra.mxu0 0
    %130 = vmatpush.bf16.msra.mxu0 0
    %131 = vmatpush.bf16.msra.mxu0 %v102
    %132 = vmatmul.bf16.gmra.mxu0 %v109
    %v133 = vpop.f32.mrf.mxu0
    %v134 = vadd.f32 0.0, %v133
    %v135 = vpop.f32.mrf.mxu0
    %136 = vdwg.mxu0
    %137 = vmatpush.bf16.msra.mxu0 0
    %138 = vmatpush.bf16.msra.mxu0 0
    %139 = vmatpush.bf16.msra.mxu0 0
    %140 = vmatpush.bf16.msra.mxu0 0
    %141 = vmatpush.bf16.msra.mxu0 0
    %142 = vmatpush.bf16.msra.mxu0 0
    %143 = vmatpush.bf16.msra.mxu0 0
    %144 = vmatpush.bf16.msra.mxu0 %v103
    %145 = vmatmul.bf16.gmra.mxu0 %v109
    %v146 = vpop.f32.mrf.mxu0
    %v147 = vadd.f32 0.0, %v146
    %v148 = vpop.f32.mrf.mxu0
    %149 = vdwg.mxu0
    %v150 = vld [vmem:[#allocation2] sm:$0xff]
    %v151 = vld [vmem:[#allocation2 + $0x8] sm:$0xff]
    %v152 = vld [vmem:[#allocation2 + $0x10] sm:$0xff]
    %v153 = vld [vmem:[#allocation2 + $0x18] sm:$0xff]
    %v154 = vld [vmem:[#allocation2 + $0x20] sm:$0xff]
    %v155 = vld [vmem:[#allocation2 + $0x28] sm:$0xff]
    %v156 = vld [vmem:[#allocation2 + $0x30] sm:$0xff]
    %v157 = vld [vmem:[#allocation2 + $0x38] sm:$0xff]
    %v158 = vld [vmem:[#allocation2 + $0x40] sm:$0xff]
    %v159 = vld [vmem:[#allocation2 + $0x48] sm:$0xff]
    %v160 = vld [vmem:[#allocation2 + $0x50] sm:$0xff]
    %v161 = vld [vmem:[#allocation2 + $0x58] sm:$0xff]
    %v162 = vld [vmem:[#allocation2 + $0x60] sm:$0xff]
    %v163 = vld [vmem:[#allocation2 + $0x68] sm:$0xff]
    %v164 = vld [vmem:[#allocation2 + $0x70] sm:$0xff]
    %v165 = vld [vmem:[#allocation2 + $0x78] sm:$0xff]
    %v182 = vunpack.c.l.b16 %v150
    %v183 = vunpack.c.h.b16 %v150
    %v184 = vunpack.c.l.b16 %v151
    %v185 = vunpack.c.h.b16 %v151
    %v186 = vunpack.c.l.b16 %v152
    %v187 = vunpack.c.h.b16 %v152
    %v188 = vunpack.c.l.b16 %v153
    %v189 = vunpack.c.h.b16 %v153
    %v190 = vunpack.c.l.b16 %v154
    %v191 = vunpack.c.h.b16 %v154
    %v192 = vunpack.c.l.b16 %v155
    %v193 = vunpack.c.h.b16 %v155
    %v194 = vunpack.c.l.b16 %v156
    %v195 = vunpack.c.h.b16 %v156
    %v196 = vunpack.c.l.b16 %v157
    %v197 = vunpack.c.h.b16 %v157
    %v198 = vunpack.c.l.b16 %v158
    %v199 = vunpack.c.h.b16 %v158
    %v200 = vunpack.c.l.b16 %v159
    %v201 = vunpack.c.h.b16 %v159
    %v202 = vunpack.c.l.b16 %v160
    %v203 = vunpack.c.h.b16 %v160
    %v204 = vunpack.c.l.b16 %v161
    %v205 = vunpack.c.h.b16 %v161
    %v206 = vunpack.c.l.b16 %v162
    %v207 = vunpack.c.h.b16 %v162
    %v208 = vunpack.c.l.b16 %v163
    %v209 = vunpack.c.h.b16 %v163
    %v210 = vunpack.c.l.b16 %v164
    %v211 = vunpack.c.h.b16 %v164
    %v212 = vunpack.c.l.b16 %v165
    %v213 = vunpack.c.h.b16 %v165
    %v214 = vpack.c.b16 %v184, %v182
    %v215 = vpack.c.b16 %v185, %v183
    %v216 = vpack.c.b16 %v188, %v186
    %v217 = vpack.c.b16 %v189, %v187
    %v218 = vpack.c.b16 %v192, %v190
    %v219 = vpack.c.b16 %v193, %v191
    %v220 = vpack.c.b16 %v196, %v194
    %v221 = vpack.c.b16 %v197, %v195
    %v222 = vpack.c.b16 %v200, %v198
    %v223 = vpack.c.b16 %v201, %v199
    %v224 = vpack.c.b16 %v204, %v202
    %v225 = vpack.c.b16 %v205, %v203
    %v226 = vpack.c.b16 %v208, %v206
    %v227 = vpack.c.b16 %v209, %v207
    %v228 = vpack.c.b16 %v212, %v210
    %v229 = vpack.c.b16 %v213, %v211
    %246 = vmatpush.bf16.msra.mxu0 %v228
    %247 = vmatpush.bf16.msra.mxu0 %v226
    %248 = vmatpush.bf16.msra.mxu0 %v224
    %249 = vmatpush.bf16.msra.mxu0 %v222
    %250 = vmatpush.bf16.msra.mxu0 %v220
    %251 = vmatpush.bf16.msra.mxu0 %v218
    %252 = vmatpush.bf16.msra.mxu0 %v216
    %253 = vmatpush.bf16.msra.mxu0 %v214
    %254 = vmatmul.bf16.gmra.mxu0 %v86
    %v255 = vpop.f32.mrf.mxu0
    %v256 = vadd.f32 %v121, %v255
    %v257 = vpop.f32.mrf.mxu0
    %258 = vdwg.mxu0
    %259 = vmatpush.bf16.msra.mxu0 %v229
    %260 = vmatpush.bf16.msra.mxu0 %v227
    %261 = vmatpush.bf16.msra.mxu0 %v225
    %262 = vmatpush.bf16.msra.mxu0 %v223
    %263 = vmatpush.bf16.msra.mxu0 %v221
    %264 = vmatpush.bf16.msra.mxu0 %v219
    %265 = vmatpush.bf16.msra.mxu0 %v217
    %266 = vmatpush.bf16.msra.mxu0 %v215
    %267 = vmatmul.bf16.gmra.mxu0 %v86
    %v268 = vpop.f32.mrf.mxu0
    %v269 = vadd.f32 %v134, %v268
    %v270 = vpop.f32.mrf.mxu0
    %271 = vdwg.mxu0
    %v272 = vld [vmem:[%s6] sm:$0x3]
    %v274 = vperm.slane %v272, 0
    %v275 = vperm.slane %v272, 1
    %v278 = vadd.f32 %v256, %v274
    %v279 = vadd.f32 %v269, %v275
    %v280 = vxor.u32 %v278, 2147483648
    %v281 = vmul.f32 %v280, 1.442695
    %v282 = vpow.pop %v281
    %v283 = vadd.f32 %v282, 1.0
    %v284 = vrcp.pop %v283
    %v285 = vmul.f32 %v283, %v284
    %v286 = vsub.f32 1.0, %v285
    %v287 = vmul.f32 %v284, %v286
    %v288 = vadd.f32 %v284, %v287
    %vm289 = vweird.f32 %v283
    %vm290 = vweird.f32 %v284
    %vm291 = vmor %vm289, %vm290
    %v292 = vsel %vm291, %v284, %v288
    %v293 = vand.u32 2147483647, %v283
    %vm294 = vcmp.eq.f32.partialorder %v293, 8.507059e+37
    %v295 = vand.u32 %v283, 2147483648
    %v296 = vor.u32 1.1754944e-38, %v295
    %v297 = vsel %vm294, %v296, %v292
    %v298 = vmul.f32 1.0, %v297
    %v299 = vxor.u32 %v279, 2147483648
    %v300 = vmul.f32 %v299, 1.442695
    %v301 = vpow.pop %v300
    %v302 = vadd.f32 %v301, 1.0
    %v303 = vrcp.pop %v302
    %v304 = vmul.f32 %v302, %v303
    %v305 = vsub.f32 1.0, %v304
    %v306 = vmul.f32 %v303, %v305
    %v307 = vadd.f32 %v303, %v306
    %vm308 = vweird.f32 %v302
    %vm309 = vweird.f32 %v303
    %vm310 = vmor %vm308, %vm309
    %v311 = vsel %vm310, %v303, %v307
    %v312 = vand.u32 2147483647, %v302
    %vm313 = vcmp.eq.f32.partialorder %v312, 8.507059e+37
    %v314 = vand.u32 %v302, 2147483648
    %v315 = vor.u32 1.1754944e-38, %v314
    %v316 = vsel %vm313, %v315, %v311
    %v317 = vmul.f32 1.0, %v316
    %v318 = vmul.f32 %v298, %v85
    %v319 = vpack.c.bf16 %v318, %v318
    %v320 = vld [vmem:[#allocation5] sm:$0xf]
    %v321 = vld [vmem:[#allocation5 + $0x4] sm:$0xf]
    %v322 = vld [vmem:[#allocation5 + $0x8] sm:$0xf]
    %v323 = vld [vmem:[#allocation5 + $0xc] sm:$0xf]
    %v324 = vld [vmem:[#allocation5 + $0x10] sm:$0xf]
    %v325 = vld [vmem:[#allocation5 + $0x14] sm:$0xf]
    %v326 = vld [vmem:[#allocation5 + $0x18] sm:$0xf]
    %v327 = vld [vmem:[#allocation5 + $0x1c] sm:$0xf]
    %v328 = vld [vmem:[#allocation5 + $0x20] sm:$0xf]
    %v329 = vld [vmem:[#allocation5 + $0x24] sm:$0xf]
    %v330 = vld [vmem:[#allocation5 + $0x28] sm:$0xf]
    %v331 = vld [vmem:[#allocation5 + $0x2c] sm:$0xf]
    %v332 = vld [vmem:[#allocation5 + $0x30] sm:$0xf]
    %v333 = vld [vmem:[#allocation5 + $0x34] sm:$0xf]
    %v334 = vld [vmem:[#allocation5 + $0x38] sm:$0xf]
    %v335 = vld [vmem:[#allocation5 + $0x3c] sm:$0xf]
    %v352 = vunpack.c.l.b16 %v320
    %v353 = vunpack.c.l.b16 %v321
    %v354 = vunpack.c.l.b16 %v322
    %v355 = vunpack.c.l.b16 %v323
    %v356 = vunpack.c.l.b16 %v324
    %v357 = vunpack.c.l.b16 %v325
    %v358 = vunpack.c.l.b16 %v326
    %v359 = vunpack.c.l.b16 %v327
    %v360 = vunpack.c.l.b16 %v328
    %v361 = vunpack.c.l.b16 %v329
    %v362 = vunpack.c.l.b16 %v330
    %v363 = vunpack.c.l.b16 %v331
    %v364 = vunpack.c.l.b16 %v332
    %v365 = vunpack.c.l.b16 %v333
    %v366 = vunpack.c.l.b16 %v334
    %v367 = vunpack.c.l.b16 %v335
    %v368 = vpack.c.b16 %v353, %v352
    %v369 = vpack.c.b16 %v355, %v354
    %v370 = vpack.c.b16 %v357, %v356
    %v371 = vpack.c.b16 %v359, %v358
    %v372 = vpack.c.b16 %v361, %v360
    %v373 = vpack.c.b16 %v363, %v362
    %v374 = vpack.c.b16 %v365, %v364
    %v375 = vpack.c.b16 %v367, %v366
    %384 = vmatpush.bf16.msra.mxu0 %v375
    %385 = vmatpush.bf16.msra.mxu0 %v374
    %386 = vmatpush.bf16.msra.mxu0 %v373
    %387 = vmatpush.bf16.msra.mxu0 %v372
    %388 = vmatpush.bf16.msra.mxu0 %v371
    %389 = vmatpush.bf16.msra.mxu0 %v370
    %390 = vmatpush.bf16.msra.mxu0 %v369
    %391 = vmatpush.bf16.msra.mxu0 %v368
    %392 = vmatmul.bf16.gmra.mxu0 %v319
    %v393 = vpop.f32.mrf.mxu0
    %v394 = vadd.f32 0.0, %v393
    %v395 = vpop.f32.mrf.mxu0
    %396 = vdwg.mxu0
    %v397 = vadd.f32 %v147, %v394
    %v398 = vld [vmem:[%s7] sm:$0x1]
    %v400 = vperm.slane %v398, 0
    %v402 = vadd.f32 %v397, %v400
    %v403 = vtanh.pop %v402
    %v404 = vsub.f32 1.0, %v317
    %v405 = vmul.f32 %v404, %v85
    %v406 = vmul.f32 %v317, %v403
    %v407 = vadd.f32 %v405, %v406
    %v408 = vpack.c.bf16 %v407, %v407
    %v409 = vld [vmem:[#allocation7] sm:$0xf]
    %v410 = vld [vmem:[#allocation7 + $0x4] sm:$0xf]
    %v411 = vld [vmem:[#allocation7 + $0x8] sm:$0xf]
    %v412 = vld [vmem:[#allocation7 + $0xc] sm:$0xf]
    %v413 = vld [vmem:[#allocation7 + $0x10] sm:$0xf]
    %v414 = vld [vmem:[#allocation7 + $0x14] sm:$0xf]
    %v415 = vld [vmem:[#allocation7 + $0x18] sm:$0xf]
    %v416 = vld [vmem:[#allocation7 + $0x1c] sm:$0xf]
    %v417 = vld [vmem:[#allocation7 + $0x20] sm:$0xf]
    %v418 = vld [vmem:[#allocation7 + $0x24] sm:$0xf]
    %v419 = vld [vmem:[#allocation7 + $0x28] sm:$0xf]
    %v420 = vld [vmem:[#allocation7 + $0x2c] sm:$0xf]
    %v421 = vld [vmem:[#allocation7 + $0x30] sm:$0xf]
    %v422 = vld [vmem:[#allocation7 + $0x34] sm:$0xf]
    %v423 = vld [vmem:[#allocation7 + $0x38] sm:$0xf]
    %v424 = vld [vmem:[#allocation7 + $0x3c] sm:$0xf]
    %v425 = vld [vmem:[%s8] sm:$0x1]
    %v427 = vperm.slane %v425, 0
    %v445 = vunpack.c.l.b16 %v409
    %v446 = vunpack.c.l.b16 %v410
    %v447 = vunpack.c.l.b16 %v411
    %v448 = vunpack.c.l.b16 %v412
    %v449 = vunpack.c.l.b16 %v413
    %v450 = vunpack.c.l.b16 %v414
    %v451 = vunpack.c.l.b16 %v415
    %v452 = vunpack.c.l.b16 %v416
    %v453 = vunpack.c.l.b16 %v417
    %v454 = vunpack.c.l.b16 %v418
    %v455 = vunpack.c.l.b16 %v419
    %v456 = vunpack.c.l.b16 %v420
    %v457 = vunpack.c.l.b16 %v421
    %v458 = vunpack.c.l.b16 %v422
    %v459 = vunpack.c.l.b16 %v423
    %v460 = vunpack.c.l.b16 %v424
    %v461 = vpack.c.b16 %v446, %v445
    %v462 = vpack.c.b16 %v448, %v447
    %v463 = vpack.c.b16 %v450, %v449
    %v464 = vpack.c.b16 %v452, %v451
    %v465 = vpack.c.b16 %v454, %v453
    %v466 = vpack.c.b16 %v456, %v455
    %v467 = vpack.c.b16 %v458, %v457
    %v468 = vpack.c.b16 %v460, %v459
    %477 = vmatpush.bf16.msra.mxu0 %v468
    %478 = vmatpush.bf16.msra.mxu0 %v467
    %479 = vmatpush.bf16.msra.mxu0 %v466
    %480 = vmatpush.bf16.msra.mxu0 %v465
    %481 = vmatpush.bf16.msra.mxu0 %v464
    %482 = vmatpush.bf16.msra.mxu0 %v463
    %483 = vmatpush.bf16.msra.mxu0 %v462
    %484 = vmatpush.bf16.msra.mxu0 %v461
    %485 = vmatmul.bf16.gmra.mxu0 %v408
    %v486 = vpop.f32.mrf.mxu0
    %v487 = vadd.f32 %v427, %v486
    %v488 = vpop.f32.mrf.mxu0
    %489 = vdwg.mxu0
    %v490 = vxor.u32 %v487, 2147483648
    %v491 = vmul.f32 %v490, 1.442695
    %v492 = vpow.pop %v491
    %v493 = vadd.f32 %v492, 1.0
    %v494 = vrcp.pop %v493
    %v495 = vmul.f32 %v493, %v494
    %v496 = vsub.f32 1.0, %v495
    %v497 = vmul.f32 %v494, %v496
    %v498 = vadd.f32 %v494, %v497
    %vm499 = vweird.f32 %v493
    %vm500 = vweird.f32 %v494
    %vm501 = vmor %vm499, %vm500
    %v502 = vsel %vm501, %v494, %v498
    %v503 = vand.u32 2147483647, %v493
    %vm504 = vcmp.eq.f32.partialorder %v503, 8.507059e+37
    %v505 = vand.u32 %v493, 2147483648
    %v506 = vor.u32 1.1754944e-38, %v505
    %v507 = vsel %vm504, %v506, %v502
    %v508 = vmul.f32 1.0, %v507
    %v509 = vpack.c.bf16 %v508, %v508
    %510 = vst [vmem:[#allocation8] sm:$0xf] %v509
    %511 = vst [vmem:[#allocation9] sm:$0xff] %v407
    // Predicated region
    $region50: #{gru_cell.1} parent=1 // pred_check
      _
    $region51: #{gru_cell.1} parent=1 // pred_check_branch
      %513 = sbr.rel (0) target = $region53
    $region52: #{gru_cell.1} parent=1 // pred_region
      %515 = vsyncadd [#allocation4], 0
      %s517 = sshll.u32 [#allocation8], 4
      %s518 = int_to_ptr.vmem [resolvable:$true] %s517
      %s519 = sshll.u32 %s9, 4
      %s520 = int_to_ptr.hbm [resolvable:$true] %s519
      %522 = dma.vmem_to_hbm [thread:$0]  %s518, 64, %s520, [#allocation4]
    $region53: #{gru_cell.1} parent=1 // pred_fallthru
      _
    // Predicated region
    $region54: #{gru_cell.1} parent=1 // pred_check
      _
    $region55: #{gru_cell.1} parent=1 // pred_check_branch
      %524 = sbr.rel (0) target = $region57
    $region56: #{gru_cell.1} parent=1 // pred_region
      %526 = vsyncadd [#allocation10], 0
      %s528 = sshll.u32 [#allocation9], 4
      %s529 = int_to_ptr.vmem [resolvable:$true] %s528
      %s530 = sshll.u32 %s10, 4
      %s531 = int_to_ptr.hbm [resolvable:$true] %s530
      %533 = dma.vmem_to_hbm [thread:$0]  %s529, 128, %s531, [#allocation10]
    $region57: #{gru_cell.1} parent=1 // pred_fallthru
      _
    // Predicated region
    $region58: #{gru_cell.1} parent=1 // pred_check
      _
    $region59: #{gru_cell.1} parent=1 // pred_check_branch
      %535 = sbr.rel (0) target = $region61
    $region60: #{gru_cell.1} parent=1 // pred_region
      %537 = dma.done [#allocation4], 64
    $region61: #{gru_cell.1} parent=1 // pred_fallthru
      _
    // Predicated region
    $region62: #{gru_cell.1} parent=1 // pred_check
      _
    $region63: #{gru_cell.1} parent=1 // pred_check_branch
      %539 = sbr.rel (0) target = $region65
    $region64: #{gru_cell.1} parent=1 // pred_region
      %541 = dma.done [#allocation10], 128
    $region65: #{gru_cell.1} parent=1 // pred_fallthru
      _
    %542 = vsyncpa [#allocation3], 1
    %543 = vsyncpa [#allocation6], 1
    %544 = vsyncpa [#allocation4], 1
    %545 = vsyncpa [#allocation10], 1

</llo_original>
